<compile_context>
chip_gen: v5e
topology: v5e:2x2
jax: 0.10.0
libtpu: 0.0.40
codegen_flags: <defaults>
</compile_context>

<pallas_src>
import jax
import jax.numpy as jnp
from jax import lax
from jax.experimental import pallas as pl
from jax.experimental.pallas import tpu as pltpu

_EPS = 1e-6
_LANES = 128


# ---------- SE(3) algebra on tuples of per-lane tiles (pure VPU elementwise) ----------

def _cross(a, b):
    ax, ay, az = a
    bx, by, bz = b
    return (ay * bz - az * by, az * bx - ax * bz, ax * by - ay * bx)


def _quat_conj(q):
    return (-q[0], -q[1], -q[2], q[3])


def _quat_mul(a, b):
    # Hamilton product, xyzw storage.
    ax, ay, az, aw = a
    bx, by, bz, bw = b
    x = aw * bx + ax * bw + ay * bz - az * by
    y = aw * by - ax * bz + ay * bw + az * bx
    z = aw * bz + ax * by - ay * bx + az * bw
    w = aw * bw - ax * bx - ay * by - az * bz
    return (x, y, z, w)


def _quat_rotate(q, v):
    # v' = v + 2w (qv x v) + 2 qv x (qv x v)
    qx, qy, qz, qw = q
    qv = (qx, qy, qz)
    t = tuple(2.0 * c for c in _cross(qv, v))
    c2 = _cross(qv, t)
    return tuple(vi + qw * ti + ci for vi, ti, ci in zip(v, t, c2))


def _se3_inv_mul(tA, qA, tB, qB):
    """(tA,qA)^{-1} o (tB,qB) = (R(qA)^{-1}(tB - tA), qA^{-1} qB).

    One rotation + one quaternion product instead of two rotations + one product
    (Inv followed by compose); mathematically identical for unit quaternions.
    """
    qAi = _quat_conj(qA)
    d = tuple(b - a for a, b in zip(tA, tB))
    return _quat_rotate(qAi, d), _quat_mul(qAi, qB)


def _se3_log(t, q):
    """SE(3) log for a unit quaternion q already canonicalized to qw >= 0.

    Returns (tau, phi) a la pypose: phi = Log(R(q)), tau = J_l(phi)^{-1} t.
    Uses 1+cos(th)=2 qw^2 and sin(th)=2 qw |qv|; one EUP rsqrt, full-precision
    reciprocals (the coef term cancels strongly, so no approximate reciprocals).
    """
    qx, qy, qz, qw = q
    v2 = qx * qx + qy * qy + qz * qz
    small = v2 < _EPS * _EPS

    inv_v = lax.rsqrt(jnp.maximum(v2, 1e-30))      # EUP; exact-enough rsqrt
    vnorm = v2 * inv_v                             # == |qv| (exactly 0 when v2 == 0)

    # theta = 2*atan2(|qv|, qw) in [0, pi] since qw >= 0 (principal branch).
    # TODO(synk): if a bundle dump shows VALU still saturating, replace arctan2
    # with a range-reduced minimax atan exploiting qw >= 0 and unit norm.
    theta = 2.0 * jnp.arctan2(vnorm, qw)

    inv_th = 1.0 / jnp.where(small, 1.0, theta)    # full-precision reciprocal
    inv_w = 1.0 / jnp.maximum(qw, _EPS)            # only used in small branch (qw ~ 1)

    # phi = scale * qv ; small-angle series matches pypose: 2/w - 2|qv|^2/(3 w^3)
    scale = jnp.where(
        small,
        2.0 * inv_w - (2.0 / 3.0) * v2 * inv_w * inv_w * inv_w,
        theta * inv_v,
    )
    phi = (scale * qx, scale * qy, scale * qz)

    # coef = 1/th^2 - (1+cos th)/(2 th sin th) = 1/th^2 - qw/(2 th |qv|)
    coef = jnp.where(
        small,
        jnp.full_like(theta, 1.0 / 12.0),
        inv_th * inv_th - 0.5 * qw * inv_th * inv_v,
    )
    c1 = _cross(phi, t)
    c2 = _cross(phi, c1)
    tau = tuple(ti - 0.5 * c1i + coef * c2i for ti, c1i, c2i in zip(t, c1, c2))
    return tau, phi


# ---------------------------------- Pallas kernel ----------------------------------

def _pose_graph_err_kernel(p_ref, g_ref, o_ref):
    # p_ref: (7, s_tile, 128) component-major poses tile.
    # g_ref: (7, 2, s_tile, 128) gathered nodes; [:, 0] = node1, [:, 1] = node2.
    # Each ref[c] / ref[c, s] is a dense (s_tile, 128) tile -> full VALU width per op.
    tp = (p_ref[0], p_ref[1], p_ref[2])
    qp = (p_ref[3], p_ref[4], p_ref[5], p_ref[6])
    t1 = (g_ref[0, 0], g_ref[1, 0], g_ref[2, 0])
    q1 = (g_ref[3, 0], g_ref[4, 0], g_ref[5, 0], g_ref[6, 0])
    t2 = (g_ref[0, 1], g_ref[1, 1], g_ref[2, 1])
    q2 = (g_ref[3, 1], g_ref[4, 1], g_ref[5, 1], g_ref[6, 1])

    # poses.Inv() @ node1.Inv() @ node2  ==  Xp^-1 o (X1^-1 o X2)
    ty, qy = _se3_inv_mul(t1, q1, t2, q2)
    te, qe = _se3_inv_mul(tp, qp, ty, qy)

    # Canonicalize the error quaternion sign (q and -q are the same rotation);
    # Log needs qw >= 0 to return the shortest-rotation (principal) branch.
    sign = jnp.where(qe[3] < 0.0, -1.0, 1.0)
    qe = tuple(sign * c for c in qe)

    tau, phi = _se3_log(te, qe)

    # TODO(synk): if Mosaic spills here (>50% ld/st slot util), strip-mine the body
    # over sublane chunks with lax.fori_loop(unroll=True) to bound live ranges.
    o_ref[0] = tau[0]
    o_ref[1] = tau[1]
    o_ref[2] = tau[2]
    o_ref[3] = phi[0]
    o_ref[4] = phi[1]
    o_ref[5] = phi[2]


# ------------------------------------- Wrapper -------------------------------------

def pose_graph_forward(nodes, edges, poses, *, max_block_rows=256,
                       component_major_output=False):
    """nodes: (N, 7) f32, edges: (E, 2) int32, poses: (E, 7) f32.

    Returns (E, 6) f32 (or (6, E) if component_major_output, saving one XLA
    transpose pass for consumers that accept component-major residuals).
    """
    nodes = jnp.asarray(nodes, jnp.float32)
    poses = jnp.asarray(poses, jnp.float32)
    edges = jnp.asarray(edges, jnp.int32)
    E = poses.shape[0]

    # ---- block sizing: s_tile*128 edges per grid step. Grow the block to amortize
    # the ~0.35us/step pipeline overhead; keep >=2 steps so v7x's two TensorCores
    # can split the "parallel" axis (single-core chips lose at most one doubling).
    s_needed = pl.cdiv(E, _LANES)
    s_tile = 8
    while s_tile < max_block_rows and -(-s_needed // (2 * s_tile)) >= 2:
        s_tile *= 2
    s_pad = max(s_tile, -(-s_needed // s_tile) * s_tile)
    ep = s_pad * _LANES
    pad = ep - E

    # ---- glue (kept in XLA), trimmed to: pad, one transpose of poses, ONE gather.
    # Padded edges point at node 0 (a valid SE(3)); zero-padded poses stay finite
    # through the kernel math and are sliced off below.
    if pad:
        edges = jnp.pad(edges, ((0, pad), (0, 0)))
        poses = jnp.pad(poses, ((0, pad), (0, 0)))

    nodes_t = nodes.T                                   # (7, N) -- tiny transpose
    idx = edges.T.reshape(-1)                           # [all node1 idx, all node2 idx]
    gathered = jnp.take(nodes_t, idx, axis=1)           # (7, 2*ep): single gather pass
    # TODO(synk): for large E / small node tables the gather could be fused in-kernel
    # via scalar-prefetched edge indices (or a one-hot MXU matmul); kept in XLA here.
    G = gathered.reshape(7, 2, s_pad, _LANES)           # metadata-only reshape
    P = poses.T.reshape(7, s_pad, _LANES)               # one transpose pass

    cost = pl.CostEstimate(flops=250 * ep, transcendentals=4 * ep,
                           bytes_accessed=(21 + 6) * 4 * ep)

    out = pl.pallas_call(
        _pose_graph_err_kernel,
        out_shape=jax.ShapeDtypeStruct((6, s_pad, _LANES), jnp.float32),
        grid=(s_pad // s_tile,),
        in_specs=[
            pl.BlockSpec((7, s_tile, _LANES), lambda i: (0, i, 0)),
            pl.BlockSpec((7, 2, s_tile, _LANES), lambda i: (0, 0, i, 0)),
        ],
        out_specs=pl.BlockSpec((6, s_tile, _LANES), lambda i: (0, i, 0)),
        compiler_params=pltpu.CompilerParams(
            dimension_semantics=("parallel",),
            # Explicit scoped-VMEM limit: v5e's 16 MiB default would be tight at
            # large blocks; 32 MiB is safe on every generation (<= physical VMEM).
            vmem_limit_bytes=32 * 1024 * 1024,
        ),
        cost_estimate=cost,
    )(P, G)

    out = out.reshape(6, ep)[:, :E]                     # (6, E) component-major
    if component_major_output:
        return out
    # TODO(synk): if the consumer immediately reduces the residual (chi^2), fuse that
    # reduction into the kernel instead of emitting (E, 6) and transposing here.
    return out.T                                        # (E, 6)


# ----------------------------- pure-JAX reference (exact) ---------------------------
# Uses the literal Inv()/compose formulation (4 rotations) and plain sqrt/divide log,
# independent of the kernel's fused inv-compose + rsqrt path.

def _se3_inv(t, q):
    qi = _quat_conj(q)
    ti = _quat_rotate(qi, t)
    return tuple(-c for c in ti), qi


def _se3_mul(tA, qA, tB, qB):
    rtB = _quat_rotate(qA, tB)
    return tuple(a + b for a, b in zip(tA, rtB)), _quat_mul(qA, qB)


def _ref_log(t, q):
    qx, qy, qz, qw = q
    sign = jnp.where(qw < 0.0, -1.0, 1.0)
    qx, qy, qz, qw = sign * qx, sign * qy, sign * qz, sign * qw
    v2 = qx * qx + qy * qy + qz * qz
    vnorm = jnp.sqrt(v2)
    theta = 2.0 * jnp.arctan2(vnorm, qw)
    small = vnorm < _EPS
    vs = jnp.where(small, 1.0, vnorm)
    ths = jnp.where(small, 1.0, theta)
    ws = jnp.maximum(qw, _EPS)
    scale = jnp.where(small, 2.0 / ws - (2.0 / 3.0) * v2 / ws**3, theta / vs)
    phi = (scale * qx, scale * qy, scale * qz)
    coef = jnp.where(small, 1.0 / 12.0, 1.0 / (ths * ths) - qw / (2.0 * ths * vs))
    c1 = _cross(phi, t)
    c2 = _cross(phi, c1)
    tau = tuple(ti - 0.5 * a + coef * b for ti, a, b in zip(t, c1, c2))
    return tau, phi


def pose_graph_reference(nodes, edges, poses):
    n1 = nodes[edges[:, 0]]
    n2 = nodes[edges[:, 1]]

    def split(x):
        return (x[:, 0], x[:, 1], x[:, 2]), (x[:, 3], x[:, 4], x[:, 5], x[:, 6])

    tp, qp = split(poses)
    t1, q1 = split(n1)
    t2, q2 = split(n2)
    tpi, qpi = _se3_inv(tp, qp)
    t1i, q1i = _se3_inv(t1, q1)
    tm, qm = _se3_mul(tpi, qpi, t1i, q1i)
    te, qe = _se3_mul(tm, qm, t2, q2)
    tau, phi = _ref_log(te, qe)
    return jnp.stack(list(tau) + list(phi), axis=-1)


if __name__ == "__main__":
    key = jax.random.PRNGKey(0)
    N, E = 8, 16
    k_nodes, k_poses, k_e0, k_e1 = jax.random.split(key, 4)

    def rand_se3(k, n):
        kt, kq = jax.random.split(k)
        t = jax.random.normal(kt, (n, 3), jnp.float32)
        q = jax.random.normal(kq, (n, 4), jnp.float32)
        q = q / jnp.linalg.norm(q, axis=-1, keepdims=True)
        q = q * jnp.where(q[:, 3:4] >= 0, 1.0, -1.0)
        return jnp.concatenate([t, q], axis=-1)  # [tx, ty, tz, qx, qy, qz, qw]

    nodes = rand_se3(k_nodes, N)          # module "parameter" (deterministic init)
    poses = rand_se3(k_poses, E)          # measured edge transforms
    edges = jnp.stack(
        [jax.random.randint(k_e0, (E,), 0, N),
         jax.random.randint(k_e1, (E,), 0, N)], axis=-1
    ).astype(jnp.int32)

    # Exercise branch points explicitly:
    #   edge 0: self-edge + identity pose  -> error ~ identity (small-angle branch)
    #   edge 1: self-edge + pi-rotation    -> error rotation ~ pi (qw ~ 0 branch)
    ident = jnp.array([0., 0., 0., 0., 0., 0., 1.], jnp.float32)
    rot_pi = jnp.array([0., 0., 0., 1., 0., 0., 0.], jnp.float32)
    poses = poses.at[0].set(ident).at[1].set(rot_pi)
    edges = edges.at[0].set(jnp.array([3, 3], jnp.int32))
    edges = edges.at[1].set(jnp.array([5, 5], jnp.int32))

    err = pose_graph_forward(nodes, edges, poses)
    err = jax.block_until_ready(err)

    assert err.shape == (E, 6), err.shape
    assert bool(jnp.all(jnp.isfinite(err)))

    ref = pose_graph_reference(nodes, edges, poses)
    assert bool(jnp.allclose(err, ref, atol=1e-4, rtol=1e-4)), float(
        jnp.max(jnp.abs(err - ref)))

    # Second shape: non-multiple-of-128 edge count to exercise padding/slicing.
    E2 = 300
    k2 = jax.random.PRNGKey(1)
    k_p2, k_a, k_b = jax.random.split(k2, 3)
    poses2 = rand_se3(k_p2, E2)
    edges2 = jnp.stack(
        [jax.random.randint(k_a, (E2,), 0, N),
         jax.random.randint(k_b, (E2,), 0, N)], axis=-1
    ).astype(jnp.int32)
    err2 = jax.block_until_ready(pose_graph_forward(nodes, edges2, poses2))
    ref2 = pose_graph_reference(nodes, edges2, poses2)
    assert err2.shape == (E2, 6)
    assert bool(jnp.all(jnp.isfinite(err2)))
    assert bool(jnp.allclose(err2, ref2, atol=1e-4, rtol=1e-4)), float(
        jnp.max(jnp.abs(err2 - ref2)))

    print("KERNEL_OK")
</pallas_src>

<mosaic_0001>
module attributes {stable_mosaic.version = 11 : i64} {
  func.func @_pose_graph_err_kernel(%arg0: i32, %arg1: memref<7x8x128xf32, #tpu.memory_space<vmem>>, %arg2: memref<7x2x8x128xf32, #tpu.memory_space<vmem>>, %arg3: memref<6x8x128xf32, #tpu.memory_space<vmem>>) attributes {dimension_semantics = [#tpu.dimension_semantics<parallel>], iteration_bounds = array<i64: 1>, scalar_prefetch = 0 : i64, scratch_operands = 0 : i64, tpu.core_type = #tpu.core_type<tc>, window_params = [{transform_indices = @transform_0, window_bounds = array<i64: 7, 8, 128>}, {transform_indices = @transform_1, window_bounds = array<i64: 7, 2, 8, 128>}, {transform_indices = @transform_2, window_bounds = array<i64: 6, 8, 128>}]} {
    %c0 = arith.constant 0 : index
    %c0_0 = arith.constant 0 : index
    %c0_1 = arith.constant 0 : index
    %0 = vector.load %arg1[%c0, %c0_0, %c0_1] : memref<7x8x128xf32, #tpu.memory_space<vmem>>, vector<1x8x128xf32>
    %1 = vector.shape_cast %0 : vector<1x8x128xf32> to vector<8x128xf32>
    %c1 = arith.constant 1 : index
    %c0_2 = arith.constant 0 : index
    %c0_3 = arith.constant 0 : index
    %2 = vector.load %arg1[%c1, %c0_2, %c0_3] : memref<7x8x128xf32, #tpu.memory_space<vmem>>, vector<1x8x128xf32>
    %3 = vector.shape_cast %2 : vector<1x8x128xf32> to vector<8x128xf32>
    %c2 = arith.constant 2 : index
    %c0_4 = arith.constant 0 : index
    %c0_5 = arith.constant 0 : index
    %4 = vector.load %arg1[%c2, %c0_4, %c0_5] : memref<7x8x128xf32, #tpu.memory_space<vmem>>, vector<1x8x128xf32>
    %5 = vector.shape_cast %4 : vector<1x8x128xf32> to vector<8x128xf32>
    %c3 = arith.constant 3 : index
    %c0_6 = arith.constant 0 : index
    %c0_7 = arith.constant 0 : index
    %6 = vector.load %arg1[%c3, %c0_6, %c0_7] : memref<7x8x128xf32, #tpu.memory_space<vmem>>, vector<1x8x128xf32>
    %7 = vector.shape_cast %6 : vector<1x8x128xf32> to vector<8x128xf32>
    %c4 = arith.constant 4 : index
    %c0_8 = arith.constant 0 : index
    %c0_9 = arith.constant 0 : index
    %8 = vector.load %arg1[%c4, %c0_8, %c0_9] : memref<7x8x128xf32, #tpu.memory_space<vmem>>, vector<1x8x128xf32>
    %9 = vector.shape_cast %8 : vector<1x8x128xf32> to vector<8x128xf32>
    %c5 = arith.constant 5 : index
    %c0_10 = arith.constant 0 : index
    %c0_11 = arith.constant 0 : index
    %10 = vector.load %arg1[%c5, %c0_10, %c0_11] : memref<7x8x128xf32, #tpu.memory_space<vmem>>, vector<1x8x128xf32>
    %11 = vector.shape_cast %10 : vector<1x8x128xf32> to vector<8x128xf32>
    %c6 = arith.constant 6 : index
    %c0_12 = arith.constant 0 : index
    %c0_13 = arith.constant 0 : index
    %12 = vector.load %arg1[%c6, %c0_12, %c0_13] : memref<7x8x128xf32, #tpu.memory_space<vmem>>, vector<1x8x128xf32>
    %13 = vector.shape_cast %12 : vector<1x8x128xf32> to vector<8x128xf32>
    %c0_14 = arith.constant 0 : index
    %c0_15 = arith.constant 0 : index
    %c0_16 = arith.constant 0 : index
    %c0_17 = arith.constant 0 : index
    %14 = vector.load %arg2[%c0_14, %c0_15, %c0_16, %c0_17] : memref<7x2x8x128xf32, #tpu.memory_space<vmem>>, vector<1x1x8x128xf32>
    %15 = vector.shape_cast %14 : vector<1x1x8x128xf32> to vector<8x128xf32>
    %c1_18 = arith.constant 1 : index
    %c0_19 = arith.constant 0 : index
    %c0_20 = arith.constant 0 : index
    %c0_21 = arith.constant 0 : index
    %16 = vector.load %arg2[%c1_18, %c0_19, %c0_20, %c0_21] : memref<7x2x8x128xf32, #tpu.memory_space<vmem>>, vector<1x1x8x128xf32>
    %17 = vector.shape_cast %16 : vector<1x1x8x128xf32> to vector<8x128xf32>
    %c2_22 = arith.constant 2 : index
    %c0_23 = arith.constant 0 : index
    %c0_24 = arith.constant 0 : index
    %c0_25 = arith.constant 0 : index
    %18 = vector.load %arg2[%c2_22, %c0_23, %c0_24, %c0_25] : memref<7x2x8x128xf32, #tpu.memory_space<vmem>>, vector<1x1x8x128xf32>
    %19 = vector.shape_cast %18 : vector<1x1x8x128xf32> to vector<8x128xf32>
    %c3_26 = arith.constant 3 : index
    %c0_27 = arith.constant 0 : index
    %c0_28 = arith.constant 0 : index
    %c0_29 = arith.constant 0 : index
    %20 = vector.load %arg2[%c3_26, %c0_27, %c0_28, %c0_29] : memref<7x2x8x128xf32, #tpu.memory_space<vmem>>, vector<1x1x8x128xf32>
    %21 = vector.shape_cast %20 : vector<1x1x8x128xf32> to vector<8x128xf32>
    %c4_30 = arith.constant 4 : index
    %c0_31 = arith.constant 0 : index
    %c0_32 = arith.constant 0 : index
    %c0_33 = arith.constant 0 : index
    %22 = vector.load %arg2[%c4_30, %c0_31, %c0_32, %c0_33] : memref<7x2x8x128xf32, #tpu.memory_space<vmem>>, vector<1x1x8x128xf32>
    %23 = vector.shape_cast %22 : vector<1x1x8x128xf32> to vector<8x128xf32>
    %c5_34 = arith.constant 5 : index
    %c0_35 = arith.constant 0 : index
    %c0_36 = arith.constant 0 : index
    %c0_37 = arith.constant 0 : index
    %24 = vector.load %arg2[%c5_34, %c0_35, %c0_36, %c0_37] : memref<7x2x8x128xf32, #tpu.memory_space<vmem>>, vector<1x1x8x128xf32>
    %25 = vector.shape_cast %24 : vector<1x1x8x128xf32> to vector<8x128xf32>
    %c6_38 = arith.constant 6 : index
    %c0_39 = arith.constant 0 : index
    %c0_40 = arith.constant 0 : index
    %c0_41 = arith.constant 0 : index
    %26 = vector.load %arg2[%c6_38, %c0_39, %c0_40, %c0_41] : memref<7x2x8x128xf32, #tpu.memory_space<vmem>>, vector<1x1x8x128xf32>
    %27 = vector.shape_cast %26 : vector<1x1x8x128xf32> to vector<8x128xf32>
    %c0_42 = arith.constant 0 : index
    %c1_43 = arith.constant 1 : index
    %c0_44 = arith.constant 0 : index
    %c0_45 = arith.constant 0 : index
    %28 = vector.load %arg2[%c0_42, %c1_43, %c0_44, %c0_45] : memref<7x2x8x128xf32, #tpu.memory_space<vmem>>, vector<1x1x8x128xf32>
    %29 = vector.shape_cast %28 : vector<1x1x8x128xf32> to vector<8x128xf32>
    %c1_46 = arith.constant 1 : index
    %c1_47 = arith.constant 1 : index
    %c0_48 = arith.constant 0 : index
    %c0_49 = arith.constant 0 : index
    %30 = vector.load %arg2[%c1_46, %c1_47, %c0_48, %c0_49] : memref<7x2x8x128xf32, #tpu.memory_space<vmem>>, vector<1x1x8x128xf32>
    %31 = vector.shape_cast %30 : vector<1x1x8x128xf32> to vector<8x128xf32>
    %c2_50 = arith.constant 2 : index
    %c1_51 = arith.constant 1 : index
    %c0_52 = arith.constant 0 : index
    %c0_53 = arith.constant 0 : index
    %32 = vector.load %arg2[%c2_50, %c1_51, %c0_52, %c0_53] : memref<7x2x8x128xf32, #tpu.memory_space<vmem>>, vector<1x1x8x128xf32>
    %33 = vector.shape_cast %32 : vector<1x1x8x128xf32> to vector<8x128xf32>
    %c3_54 = arith.constant 3 : index
    %c1_55 = arith.constant 1 : index
    %c0_56 = arith.constant 0 : index
    %c0_57 = arith.constant 0 : index
    %34 = vector.load %arg2[%c3_54, %c1_55, %c0_56, %c0_57] : memref<7x2x8x128xf32, #tpu.memory_space<vmem>>, vector<1x1x8x128xf32>
    %35 = vector.shape_cast %34 : vector<1x1x8x128xf32> to vector<8x128xf32>
    %c4_58 = arith.constant 4 : index
    %c1_59 = arith.constant 1 : index
    %c0_60 = arith.constant 0 : index
    %c0_61 = arith.constant 0 : index
    %36 = vector.load %arg2[%c4_58, %c1_59, %c0_60, %c0_61] : memref<7x2x8x128xf32, #tpu.memory_space<vmem>>, vector<1x1x8x128xf32>
    %37 = vector.shape_cast %36 : vector<1x1x8x128xf32> to vector<8x128xf32>
    %c5_62 = arith.constant 5 : index
    %c1_63 = arith.constant 1 : index
    %c0_64 = arith.constant 0 : index
    %c0_65 = arith.constant 0 : index
    %38 = vector.load %arg2[%c5_62, %c1_63, %c0_64, %c0_65] : memref<7x2x8x128xf32, #tpu.memory_space<vmem>>, vector<1x1x8x128xf32>
    %39 = vector.shape_cast %38 : vector<1x1x8x128xf32> to vector<8x128xf32>
    %c6_66 = arith.constant 6 : index
    %c1_67 = arith.constant 1 : index
    %c0_68 = arith.constant 0 : index
    %c0_69 = arith.constant 0 : index
    %40 = vector.load %arg2[%c6_66, %c1_67, %c0_68, %c0_69] : memref<7x2x8x128xf32, #tpu.memory_space<vmem>>, vector<1x1x8x128xf32>
    %41 = vector.shape_cast %40 : vector<1x1x8x128xf32> to vector<8x128xf32>
    %cst = arith.constant 0.000000e+00 : f32
    %42 = vector.broadcast %cst : f32 to vector<8x128xf32>
    %43 = arith.subf %42, %21 : vector<8x128xf32>
    %cst_70 = arith.constant 0.000000e+00 : f32
    %44 = vector.broadcast %cst_70 : f32 to vector<8x128xf32>
    %45 = arith.subf %44, %23 : vector<8x128xf32>
    %cst_71 = arith.constant 0.000000e+00 : f32
    %46 = vector.broadcast %cst_71 : f32 to vector<8x128xf32>
    %47 = arith.subf %46, %25 : vector<8x128xf32>
    %48 = arith.subf %29, %15 : vector<8x128xf32>
    %49 = arith.subf %31, %17 : vector<8x128xf32>
    %50 = arith.subf %33, %19 : vector<8x128xf32>
    %51 = arith.mulf %45, %50 : vector<8x128xf32>
    %52 = arith.mulf %47, %49 : vector<8x128xf32>
    %53 = arith.subf %51, %52 : vector<8x128xf32>
    %54 = arith.mulf %47, %48 : vector<8x128xf32>
    %55 = arith.mulf %43, %50 : vector<8x128xf32>
    %56 = arith.subf %54, %55 : vector<8x128xf32>
    %57 = arith.mulf %43, %49 : vector<8x128xf32>
    %58 = arith.mulf %45, %48 : vector<8x128xf32>
    %59 = arith.subf %57, %58 : vector<8x128xf32>
    %cst_72 = arith.constant 2.000000e+00 : f32
    %60 = vector.broadcast %cst_72 : f32 to vector<8x128xf32>
    %61 = arith.mulf %60, %53 : vector<8x128xf32>
    %cst_73 = arith.constant 2.000000e+00 : f32
    %62 = vector.broadcast %cst_73 : f32 to vector<8x128xf32>
    %63 = arith.mulf %62, %56 : vector<8x128xf32>
    %cst_74 = arith.constant 2.000000e+00 : f32
    %64 = vector.broadcast %cst_74 : f32 to vector<8x128xf32>
    %65 = arith.mulf %64, %59 : vector<8x128xf32>
    %66 = arith.mulf %45, %65 : vector<8x128xf32>
    %67 = arith.mulf %47, %63 : vector<8x128xf32>
    %68 = arith.subf %66, %67 : vector<8x128xf32>
    %69 = arith.mulf %47, %61 : vector<8x128xf32>
    %70 = arith.mulf %43, %65 : vector<8x128xf32>
    %71 = arith.subf %69, %70 : vector<8x128xf32>
    %72 = arith.mulf %43, %63 : vector<8x128xf32>
    %73 = arith.mulf %45, %61 : vector<8x128xf32>
    %74 = arith.subf %72, %73 : vector<8x128xf32>
    %75 = arith.mulf %27, %61 : vector<8x128xf32>
    %76 = arith.addf %48, %75 : vector<8x128xf32>
    %77 = arith.addf %76, %68 : vector<8x128xf32>
    %78 = arith.mulf %27, %63 : vector<8x128xf32>
    %79 = arith.addf %49, %78 : vector<8x128xf32>
    %80 = arith.addf %79, %71 : vector<8x128xf32>
    %81 = arith.mulf %27, %65 : vector<8x128xf32>
    %82 = arith.addf %50, %81 : vector<8x128xf32>
    %83 = arith.addf %82, %74 : vector<8x128xf32>
    %84 = arith.mulf %27, %35 : vector<8x128xf32>
    %85 = arith.mulf %43, %41 : vector<8x128xf32>
    %86 = arith.addf %84, %85 : vector<8x128xf32>
    %87 = arith.mulf %45, %39 : vector<8x128xf32>
    %88 = arith.addf %86, %87 : vector<8x128xf32>
    %89 = arith.mulf %47, %37 : vector<8x128xf32>
    %90 = arith.subf %88, %89 : vector<8x128xf32>
    %91 = arith.mulf %27, %37 : vector<8x128xf32>
    %92 = arith.mulf %43, %39 : vector<8x128xf32>
    %93 = arith.subf %91, %92 : vector<8x128xf32>
    %94 = arith.mulf %45, %41 : vector<8x128xf32>
    %95 = arith.addf %93, %94 : vector<8x128xf32>
    %96 = arith.mulf %47, %35 : vector<8x128xf32>
    %97 = arith.addf %95, %96 : vector<8x128xf32>
    %98 = arith.mulf %27, %39 : vector<8x128xf32>
    %99 = arith.mulf %43, %37 : vector<8x128xf32>
    %100 = arith.addf %98, %99 : vector<8x128xf32>
    %101 = arith.mulf %45, %35 : vector<8x128xf32>
    %102 = arith.subf %100, %101 : vector<8x128xf32>
    %103 = arith.mulf %47, %41 : vector<8x128xf32>
    %104 = arith.addf %102, %103 : vector<8x128xf32>
    %105 = arith.mulf %27, %41 : vector<8x128xf32>
    %106 = arith.mulf %43, %35 : vector<8x128xf32>
    %107 = arith.subf %105, %106 : vector<8x128xf32>
    %108 = arith.mulf %45, %37 : vector<8x128xf32>
    %109 = arith.subf %107, %108 : vector<8x128xf32>
    %110 = arith.mulf %47, %39 : vector<8x128xf32>
    %111 = arith.subf %109, %110 : vector<8x128xf32>
    %cst_75 = arith.constant 0.000000e+00 : f32
    %112 = vector.broadcast %cst_75 : f32 to vector<8x128xf32>
    %113 = arith.subf %112, %7 : vector<8x128xf32>
    %cst_76 = arith.constant 0.000000e+00 : f32
    %114 = vector.broadcast %cst_76 : f32 to vector<8x128xf32>
    %115 = arith.subf %114, %9 : vector<8x128xf32>
    %cst_77 = arith.constant 0.000000e+00 : f32
    %116 = vector.broadcast %cst_77 : f32 to vector<8x128xf32>
    %117 = arith.subf %116, %11 : vector<8x128xf32>
    %118 = arith.subf %77, %1 : vector<8x128xf32>
    %119 = arith.subf %80, %3 : vector<8x128xf32>
    %120 = arith.subf %83, %5 : vector<8x128xf32>
    %121 = arith.mulf %115, %120 : vector<8x128xf32>
    %122 = arith.mulf %117, %119 : vector<8x128xf32>
    %123 = arith.subf %121, %122 : vector<8x128xf32>
    %124 = arith.mulf %117, %118 : vector<8x128xf32>
    %125 = arith.mulf %113, %120 : vector<8x128xf32>
    %126 = arith.subf %124, %125 : vector<8x128xf32>
    %127 = arith.mulf %113, %119 : vector<8x128xf32>
    %128 = arith.mulf %115, %118 : vector<8x128xf32>
    %129 = arith.subf %127, %128 : vector<8x128xf32>
    %cst_78 = arith.constant 2.000000e+00 : f32
    %130 = vector.broadcast %cst_78 : f32 to vector<8x128xf32>
    %131 = arith.mulf %130, %123 : vector<8x128xf32>
    %cst_79 = arith.constant 2.000000e+00 : f32
    %132 = vector.broadcast %cst_79 : f32 to vector<8x128xf32>
    %133 = arith.mulf %132, %126 : vector<8x128xf32>
    %cst_80 = arith.constant 2.000000e+00 : f32
    %134 = vector.broadcast %cst_80 : f32 to vector<8x128xf32>
    %135 = arith.mulf %134, %129 : vector<8x128xf32>
    %136 = arith.mulf %115, %135 : vector<8x128xf32>
    %137 = arith.mulf %117, %133 : vector<8x128xf32>
    %138 = arith.subf %136, %137 : vector<8x128xf32>
    %139 = arith.mulf %117, %131 : vector<8x128xf32>
    %140 = arith.mulf %113, %135 : vector<8x128xf32>
    %141 = arith.subf %139, %140 : vector<8x128xf32>
    %142 = arith.mulf %113, %133 : vector<8x128xf32>
    %143 = arith.mulf %115, %131 : vector<8x128xf32>
    %144 = arith.subf %142, %143 : vector<8x128xf32>
    %145 = arith.mulf %13, %131 : vector<8x128xf32>
    %146 = arith.addf %118, %145 : vector<8x128xf32>
    %147 = arith.addf %146, %138 : vector<8x128xf32>
    %148 = arith.mulf %13, %133 : vector<8x128xf32>
    %149 = arith.addf %119, %148 : vector<8x128xf32>
    %150 = arith.addf %149, %141 : vector<8x128xf32>
    %151 = arith.mulf %13, %135 : vector<8x128xf32>
    %152 = arith.addf %120, %151 : vector<8x128xf32>
    %153 = arith.addf %152, %144 : vector<8x128xf32>
    %154 = arith.mulf %13, %90 : vector<8x128xf32>
    %155 = arith.mulf %113, %111 : vector<8x128xf32>
    %156 = arith.addf %154, %155 : vector<8x128xf32>
    %157 = arith.mulf %115, %104 : vector<8x128xf32>
    %158 = arith.addf %156, %157 : vector<8x128xf32>
    %159 = arith.mulf %117, %97 : vector<8x128xf32>
    %160 = arith.subf %158, %159 : vector<8x128xf32>
    %161 = arith.mulf %13, %97 : vector<8x128xf32>
    %162 = arith.mulf %113, %104 : vector<8x128xf32>
    %163 = arith.subf %161, %162 : vector<8x128xf32>
    %164 = arith.mulf %115, %111 : vector<8x128xf32>
    %165 = arith.addf %163, %164 : vector<8x128xf32>
    %166 = arith.mulf %117, %90 : vector<8x128xf32>
    %167 = arith.addf %165, %166 : vector<8x128xf32>
    %168 = arith.mulf %13, %104 : vector<8x128xf32>
    %169 = arith.mulf %113, %97 : vector<8x128xf32>
    %170 = arith.addf %168, %169 : vector<8x128xf32>
    %171 = arith.mulf %115, %90 : vector<8x128xf32>
    %172 = arith.subf %170, %171 : vector<8x128xf32>
    %173 = arith.mulf %117, %111 : vector<8x128xf32>
    %174 = arith.addf %172, %173 : vector<8x128xf32>
    %175 = arith.mulf %13, %111 : vector<8x128xf32>
    %176 = arith.mulf %113, %90 : vector<8x128xf32>
    %177 = arith.subf %175, %176 : vector<8x128xf32>
    %178 = arith.mulf %115, %97 : vector<8x128xf32>
    %179 = arith.subf %177, %178 : vector<8x128xf32>
    %180 = arith.mulf %117, %104 : vector<8x128xf32>
    %181 = arith.subf %179, %180 : vector<8x128xf32>
    %cst_81 = arith.constant 0.000000e+00 : f32
    %182 = vector.broadcast %cst_81 : f32 to vector<8x128xf32>
    %183 = arith.cmpf olt, %181, %182 : vector<8x128xf32>
    %cst_82 = arith.constant -1.000000e+00 : f32
    %cst_83 = arith.constant 1.000000e+00 : f32
    %184 = vector.broadcast %cst_82 : f32 to vector<8x128xf32>
    %185 = vector.broadcast %cst_83 : f32 to vector<8x128xf32>
    %186 = arith.select %183, %184, %185 : vector<8x128xi1>, vector<8x128xf32>
    %187 = arith.mulf %186, %160 : vector<8x128xf32>
    %188 = arith.mulf %186, %167 : vector<8x128xf32>
    %189 = arith.mulf %186, %174 : vector<8x128xf32>
    %190 = arith.mulf %186, %181 : vector<8x128xf32>
    %191 = arith.mulf %187, %187 : vector<8x128xf32>
    %192 = arith.mulf %188, %188 : vector<8x128xf32>
    %193 = arith.addf %191, %192 : vector<8x128xf32>
    %194 = arith.mulf %189, %189 : vector<8x128xf32>
    %195 = arith.addf %193, %194 : vector<8x128xf32>
    %cst_84 = arith.constant 9.99999996E-13 : f32
    %196 = vector.broadcast %cst_84 : f32 to vector<8x128xf32>
    %197 = arith.cmpf olt, %195, %196 : vector<8x128xf32>
    %cst_85 = arith.constant 1.000000e-30 : f32
    %198 = vector.broadcast %cst_85 : f32 to vector<8x128xf32>
    %199 = arith.maximumf %195, %198 : vector<8x128xf32>
    %200 = math.rsqrt %199 : vector<8x128xf32>
    %201 = arith.mulf %195, %200 : vector<8x128xf32>
    %202 = math.atan2 %201, %190 : vector<8x128xf32>
    %cst_86 = arith.constant 2.000000e+00 : f32
    %203 = vector.broadcast %cst_86 : f32 to vector<8x128xf32>
    %204 = arith.mulf %203, %202 : vector<8x128xf32>
    %cst_87 = arith.constant 1.000000e+00 : f32
    %205 = vector.broadcast %cst_87 : f32 to vector<8x128xf32>
    %206 = arith.select %197, %205, %204 : vector<8x128xi1>, vector<8x128xf32>
    %cst_88 = arith.constant 1.000000e+00 : f32
    %207 = vector.broadcast %cst_88 : f32 to vector<8x128xf32>
    %208 = arith.divf %207, %206 : vector<8x128xf32>
    %cst_89 = arith.constant 9.99999997E-7 : f32
    %209 = vector.broadcast %cst_89 : f32 to vector<8x128xf32>
    %210 = arith.maximumf %190, %209 : vector<8x128xf32>
    %cst_90 = arith.constant 1.000000e+00 : f32
    %211 = vector.broadcast %cst_90 : f32 to vector<8x128xf32>
    %212 = arith.divf %211, %210 : vector<8x128xf32>
    %cst_91 = arith.constant 2.000000e+00 : f32
    %213 = vector.broadcast %cst_91 : f32 to vector<8x128xf32>
    %214 = arith.mulf %213, %212 : vector<8x128xf32>
    %cst_92 = arith.constant 0.666666686 : f32
    %215 = vector.broadcast %cst_92 : f32 to vector<8x128xf32>
    %216 = arith.mulf %215, %195 : vector<8x128xf32>
    %217 = arith.mulf %216, %212 : vector<8x128xf32>
    %218 = arith.mulf %217, %212 : vector<8x128xf32>
    %219 = arith.mulf %218, %212 : vector<8x128xf32>
    %220 = arith.subf %214, %219 : vector<8x128xf32>
    %221 = arith.mulf %204, %200 : vector<8x128xf32>
    %222 = arith.select %197, %220, %221 : vector<8x128xi1>, vector<8x128xf32>
    %223 = arith.mulf %222, %187 : vector<8x128xf32>
    %224 = arith.mulf %222, %188 : vector<8x128xf32>
    %225 = arith.mulf %222, %189 : vector<8x128xf32>
    %cst_93 = arith.constant 0.0833333358 : f32
    %226 = vector.broadcast %cst_93 : f32 to vector<8x128xf32>
    %227 = arith.mulf %208, %208 : vector<8x128xf32>
    %cst_94 = arith.constant 5.000000e-01 : f32
    %228 = vector.broadcast %cst_94 : f32 to vector<8x128xf32>
    %229 = arith.mulf %228, %190 : vector<8x128xf32>
    %230 = arith.mulf %229, %208 : vector<8x128xf32>
    %231 = arith.mulf %230, %200 : vector<8x128xf32>
    %232 = arith.subf %227, %231 : vector<8x128xf32>
    %233 = arith.select %197, %226, %232 : vector<8x128xi1>, vector<8x128xf32>
    %234 = arith.mulf %224, %153 : vector<8x128xf32>
    %235 = arith.mulf %225, %150 : vector<8x128xf32>
    %236 = arith.subf %234, %235 : vector<8x128xf32>
    %237 = arith.mulf %225, %147 : vector<8x128xf32>
    %238 = arith.mulf %223, %153 : vector<8x128xf32>
    %239 = arith.subf %237, %238 : vector<8x128xf32>
    %240 = arith.mulf %223, %150 : vector<8x128xf32>
    %241 = arith.mulf %224, %147 : vector<8x128xf32>
    %242 = arith.subf %240, %241 : vector<8x128xf32>
    %243 = arith.mulf %224, %242 : vector<8x128xf32>
    %244 = arith.mulf %225, %239 : vector<8x128xf32>
    %245 = arith.subf %243, %244 : vector<8x128xf32>
    %246 = arith.mulf %225, %236 : vector<8x128xf32>
    %247 = arith.mulf %223, %242 : vector<8x128xf32>
    %248 = arith.subf %246, %247 : vector<8x128xf32>
    %249 = arith.mulf %223, %239 : vector<8x128xf32>
    %250 = arith.mulf %224, %236 : vector<8x128xf32>
    %251 = arith.subf %249, %250 : vector<8x128xf32>
    %cst_95 = arith.constant 5.000000e-01 : f32
    %252 = vector.broadcast %cst_95 : f32 to vector<8x128xf32>
    %253 = arith.mulf %252, %236 : vector<8x128xf32>
    %254 = arith.subf %147, %253 : vector<8x128xf32>
    %255 = arith.mulf %233, %245 : vector<8x128xf32>
    %256 = arith.addf %254, %255 : vector<8x128xf32>
    %cst_96 = arith.constant 5.000000e-01 : f32
    %257 = vector.broadcast %cst_96 : f32 to vector<8x128xf32>
    %258 = arith.mulf %257, %239 : vector<8x128xf32>
    %259 = arith.subf %150, %258 : vector<8x128xf32>
    %260 = arith.mulf %233, %248 : vector<8x128xf32>
    %261 = arith.addf %259, %260 : vector<8x128xf32>
    %cst_97 = arith.constant 5.000000e-01 : f32
    %262 = vector.broadcast %cst_97 : f32 to vector<8x128xf32>
    %263 = arith.mulf %262, %242 : vector<8x128xf32>
    %264 = arith.subf %153, %263 : vector<8x128xf32>
    %265 = arith.mulf %233, %251 : vector<8x128xf32>
    %266 = arith.addf %264, %265 : vector<8x128xf32>
    %c0_98 = arith.constant 0 : index
    %c0_99 = arith.constant 0 : index
    %c0_100 = arith.constant 0 : index
    %267 = vector.load %arg3[%c0_98, %c0_99, %c0_100] : memref<6x8x128xf32, #tpu.memory_space<vmem>>, vector<1x8x128xf32>
    %268 = vector.shape_cast %267 : vector<1x8x128xf32> to vector<8x128xf32>
    %269 = vector.shape_cast %256 : vector<8x128xf32> to vector<1x8x128xf32>
    tpu.vector_store %arg3[%c0_98, %c0_99, %c0_100], %269 {strides = array<i32>} : memref<6x8x128xf32, #tpu.memory_space<vmem>>, vector<1x8x128xf32>,
    %c1_101 = arith.constant 1 : index
    %c0_102 = arith.constant 0 : index
    %c0_103 = arith.constant 0 : index
    %270 = vector.load %arg3[%c1_101, %c0_102, %c0_103] : memref<6x8x128xf32, #tpu.memory_space<vmem>>, vector<1x8x128xf32>
    %271 = vector.shape_cast %270 : vector<1x8x128xf32> to vector<8x128xf32>
    %272 = vector.shape_cast %261 : vector<8x128xf32> to vector<1x8x128xf32>
    tpu.vector_store %arg3[%c1_101, %c0_102, %c0_103], %272 {strides = array<i32>} : memref<6x8x128xf32, #tpu.memory_space<vmem>>, vector<1x8x128xf32>,
    %c2_104 = arith.constant 2 : index
    %c0_105 = arith.constant 0 : index
    %c0_106 = arith.constant 0 : index
    %273 = vector.load %arg3[%c2_104, %c0_105, %c0_106] : memref<6x8x128xf32, #tpu.memory_space<vmem>>, vector<1x8x128xf32>
    %274 = vector.shape_cast %273 : vector<1x8x128xf32> to vector<8x128xf32>
    %275 = vector.shape_cast %266 : vector<8x128xf32> to vector<1x8x128xf32>
    tpu.vector_store %arg3[%c2_104, %c0_105, %c0_106], %275 {strides = array<i32>} : memref<6x8x128xf32, #tpu.memory_space<vmem>>, vector<1x8x128xf32>,
    %c3_107 = arith.constant 3 : index
    %c0_108 = arith.constant 0 : index
    %c0_109 = arith.constant 0 : index
    %276 = vector.load %arg3[%c3_107, %c0_108, %c0_109] : memref<6x8x128xf32, #tpu.memory_space<vmem>>, vector<1x8x128xf32>
    %277 = vector.shape_cast %276 : vector<1x8x128xf32> to vector<8x128xf32>
    %278 = vector.shape_cast %223 : vector<8x128xf32> to vector<1x8x128xf32>
    tpu.vector_store %arg3[%c3_107, %c0_108, %c0_109], %278 {strides = array<i32>} : memref<6x8x128xf32, #tpu.memory_space<vmem>>, vector<1x8x128xf32>,
    %c4_110 = arith.constant 4 : index
    %c0_111 = arith.constant 0 : index
    %c0_112 = arith.constant 0 : index
    %279 = vector.load %arg3[%c4_110, %c0_111, %c0_112] : memref<6x8x128xf32, #tpu.memory_space<vmem>>, vector<1x8x128xf32>
    %280 = vector.shape_cast %279 : vector<1x8x128xf32> to vector<8x128xf32>
    %281 = vector.shape_cast %224 : vector<8x128xf32> to vector<1x8x128xf32>
    tpu.vector_store %arg3[%c4_110, %c0_111, %c0_112], %281 {strides = array<i32>} : memref<6x8x128xf32, #tpu.memory_space<vmem>>, vector<1x8x128xf32>,
    %c5_113 = arith.constant 5 : index
    %c0_114 = arith.constant 0 : index
    %c0_115 = arith.constant 0 : index
    %282 = vector.load %arg3[%c5_113, %c0_114, %c0_115] : memref<6x8x128xf32, #tpu.memory_space<vmem>>, vector<1x8x128xf32>
    %283 = vector.shape_cast %282 : vector<1x8x128xf32> to vector<8x128xf32>
    %284 = vector.shape_cast %225 : vector<8x128xf32> to vector<1x8x128xf32>
    tpu.vector_store %arg3[%c5_113, %c0_114, %c0_115], %284 {strides = array<i32>} : memref<6x8x128xf32, #tpu.memory_space<vmem>>, vector<1x8x128xf32>,
    return
  }
  func.func @transform_0(%arg0: i32) -> (i32, i32, i32) {
    %c0_i32 = arith.constant 0 : i32
    %c0_i32_0 = arith.constant 0 : i32
    %c0_i32_1 = arith.constant 0 : i32
    return %c0_i32, %arg0, %c0_i32_0 : i32, i32, i32
  }
  func.func @transform_1(%arg0: i32) -> (i32, i32, i32, i32) {
    %c0_i32 = arith.constant 0 : i32
    %c0_i32_0 = arith.constant 0 : i32
    %c0_i32_1 = arith.constant 0 : i32
    %c0_i32_2 = arith.constant 0 : i32
    return %c0_i32, %c0_i32_0, %arg0, %c0_i32_1 : i32, i32, i32, i32
  }
  func.func @transform_2(%arg0: i32) -> (i32, i32, i32) {
    %c0_i32 = arith.constant 0 : i32
    %c0_i32_0 = arith.constant 0 : i32
    %c0_i32_1 = arith.constant 0 : i32
    return %c0_i32, %arg0, %c0_i32_0 : i32, i32, i32
  }
}

</mosaic_0001>

<llo_original>
// kernel: tpu_custom_call.1
$region0: #{tpu_custom_call.1}
  #allocation0 [shape = 'u32[]', space=smem, size = 0x4, offset = 0x4, fixed_abs, tag = 'smem constant byte address 0x4 - core index']
  #allocation1 [shape = 'u32[72,128]{1,0:T(1,128)}', space=vmem, size = 0x9000, scoped, tag = 'internal scratch']
  %s0 = inlined_call_operand.hbm [shape: f32[7,8,128], index: 0, kind: input, shape index: {}]
  %s1 = inlined_call_operand.hbm [shape: f32[7,2,8,128], index: 1, kind: input, shape index: {}]
  %s2 = inlined_call_operand.hbm [shape: f32[6,8,128], index: 2, kind: output, shape index: {}]
  %s3 = sld [smem:[#allocation0]]
  $region26: #{tpu_custom_call.1} parent=0
    _
  %s5 = ssub.s32 1, %s3
  %s6 = scalar_select 0, %s5, %s3
  $region1: #{tpu_custom_call.1} parent=0
    #allocation2 [shape = 'u8[28672]{0}', space=vmem, size = 0x7000, scoped, tag = 'input window, operand 0, single buffered']
    #allocation3 [shape = 's32[1]{0}', space=sflag, size = 0x4, scoped, tag = 'scoped memory for tpu_custom_call.1']
    #allocation4 [shape = 's32[1]{0}', space=sflag, size = 0x4, scoped, tag = 'scoped memory for tpu_custom_call.1']
    #allocation5 [shape = 'u8[57344]{0}', space=vmem, size = 0xe000, scoped, tag = 'input window, operand 1, single buffered']
    #allocation6 [shape = 's32[1]{0}', space=sflag, size = 0x4, scoped, tag = 'scoped memory for tpu_custom_call.1']
    #allocation7 [shape = 'u8[24576]{0}', space=vmem, size = 0x6000, scoped, tag = 'output window, operand 0, single buffered']
    %7 = vsyncpa [#allocation3], 0
    %8 = vsyncpa [#allocation6], 0
    %9 = vsyncpa [#allocation4], 0
    // Predicated region
    $region2: #{tpu_custom_call.1} parent=1 // pred_check
      _
    $region3: #{tpu_custom_call.1} parent=1 // pred_check_branch
      %11 = sbr.rel (0) target = $region5
    $region4: #{tpu_custom_call.1} parent=1 // pred_region
      %13 = vsyncadd [#allocation3], 0
      %s14 = sshll.u32 %s0, 4
      %s15 = int_to_ptr.hbm [resolvable:$true] %s14
      %s16 = sshll.u32 [#allocation2], 4
      %s17 = int_to_ptr.vmem [resolvable:$true] %s16
      %22 = dma.hbm_to_vmem [thread:$0]  %s15, 896, %s17, [#allocation3], 128, 128, 8
    $region5: #{tpu_custom_call.1} parent=1 // pred_fallthru
      _
    // Predicated region
    $region6: #{tpu_custom_call.1} parent=1 // pred_check
      _
    $region7: #{tpu_custom_call.1} parent=1 // pred_check_branch
      %24 = sbr.rel (0) target = $region9
    $region8: #{tpu_custom_call.1} parent=1 // pred_region
      %26 = vsyncadd [#allocation6], 0
      %s27 = sshll.u32 %s1, 4
      %s28 = int_to_ptr.hbm [resolvable:$true] %s27
      %s29 = sshll.u32 [#allocation5], 4
      %s30 = int_to_ptr.vmem [resolvable:$true] %s29
      %35 = dma.hbm_to_vmem [thread:$0]  %s28, 1792, %s30, [#allocation6], 128, 128, 8
    $region9: #{tpu_custom_call.1} parent=1 // pred_fallthru
      _
    // Predicated region
    $region10: #{tpu_custom_call.1} parent=1 // pred_check
      _
    $region11: #{tpu_custom_call.1} parent=1 // pred_check_branch
      %37 = sbr.rel (0) target = $region13
    $region12: #{tpu_custom_call.1} parent=1 // pred_region
      %39 = dma.done [#allocation3], 896
    $region13: #{tpu_custom_call.1} parent=1 // pred_fallthru
      _
    // Predicated region
    $region14: #{tpu_custom_call.1} parent=1 // pred_check
      _
    $region15: #{tpu_custom_call.1} parent=1 // pred_check_branch
      %41 = sbr.rel (0) target = $region17
    $region16: #{tpu_custom_call.1} parent=1 // pred_region
      %43 = dma.done [#allocation6], 1792
    $region17: #{tpu_custom_call.1} parent=1 // pred_fallthru
      _
    %v44 = vld [vmem:[#allocation2] sm:$0xff]
    %s45 = scalar_lea.vmem [#allocation2], 8
    %v46 = vld [vmem:[%s45] sm:$0xff]
    %s47 = scalar_lea.vmem [#allocation2], 16
    %v48 = vld [vmem:[%s47] sm:$0xff]
    %s49 = scalar_lea.vmem [#allocation2], 24
    %v50 = vld [vmem:[%s49] sm:$0xff]
    %s51 = scalar_lea.vmem [#allocation2], 32
    %v52 = vld [vmem:[%s51] sm:$0xff]
    %s53 = scalar_lea.vmem [#allocation2], 40
    %v54 = vld [vmem:[%s53] sm:$0xff]
    %s55 = scalar_lea.vmem [#allocation2], 48
    %v56 = vld [vmem:[%s55] sm:$0xff]
    %v57 = vld [vmem:[#allocation5] sm:$0xff]
    %s58 = scalar_lea.vmem [#allocation5], 16
    %v59 = vld [vmem:[%s58] sm:$0xff]
    %s60 = scalar_lea.vmem [#allocation5], 32
    %v61 = vld [vmem:[%s60] sm:$0xff]
    %s62 = scalar_lea.vmem [#allocation5], 48
    %v63 = vld [vmem:[%s62] sm:$0xff]
    %s64 = scalar_lea.vmem [#allocation5], 64
    %v65 = vld [vmem:[%s64] sm:$0xff]
    %s66 = scalar_lea.vmem [#allocation5], 80
    %v67 = vld [vmem:[%s66] sm:$0xff]
    %s68 = scalar_lea.vmem [#allocation5], 96
    %v69 = vld [vmem:[%s68] sm:$0xff]
    %s70 = scalar_lea.vmem [#allocation5], 8
    %v71 = vld [vmem:[%s70] sm:$0xff]
    %s72 = scalar_lea.vmem [#allocation5], 24
    %v73 = vld [vmem:[%s72] sm:$0xff]
    %s74 = scalar_lea.vmem [#allocation5], 40
    %v75 = vld [vmem:[%s74] sm:$0xff]
    %s76 = scalar_lea.vmem [#allocation5], 56
    %v77 = vld [vmem:[%s76] sm:$0xff]
    %s78 = scalar_lea.vmem [#allocation5], 72
    %v79 = vld [vmem:[%s78] sm:$0xff]
    %s80 = scalar_lea.vmem [#allocation5], 88
    %v81 = vld [vmem:[%s80] sm:$0xff]
    %s82 = scalar_lea.vmem [#allocation5], 104
    %v83 = vld [vmem:[%s82] sm:$0xff]
    %v84 = vsub.f32 0.0, %v63
    %v85 = vsub.f32 0.0, %v65
    %v86 = vsub.f32 0.0, %v67
    %v87 = vsub.f32 %v71, %v57
    %v88 = vsub.f32 %v73, %v59
    %v89 = vsub.f32 %v75, %v61
    %v90 = vmul.f32 %v85, %v89
    %v91 = vmul.f32 %v86, %v88
    %v92 = vsub.f32 %v90, %v91
    %v93 = vmul.f32 %v86, %v87
    %v94 = vmul.f32 %v84, %v89
    %v95 = vsub.f32 %v93, %v94
    %v96 = vmul.f32 %v84, %v88
    %v97 = vmul.f32 %v85, %v87
    %v98 = vsub.f32 %v96, %v97
    %v99 = vmul.f32 %v92, 2.0
    %v100 = vmul.f32 %v95, 2.0
    %v101 = vmul.f32 %v98, 2.0
    %v102 = vmul.f32 %v85, %v101
    %v103 = vmul.f32 %v86, %v100
    %v104 = vsub.f32 %v102, %v103
    %v105 = vmul.f32 %v86, %v99
    %v106 = vmul.f32 %v84, %v101
    %v107 = vsub.f32 %v105, %v106
    %v108 = vmul.f32 %v84, %v100
    %v109 = vmul.f32 %v85, %v99
    %v110 = vsub.f32 %v108, %v109
    %v111 = vmul.f32 %v69, %v99
    %v112 = vadd.f32 %v87, %v111
    %v113 = vadd.f32 %v112, %v104
    %v114 = vmul.f32 %v69, %v100
    %v115 = vadd.f32 %v88, %v114
    %v116 = vadd.f32 %v115, %v107
    %v117 = vmul.f32 %v69, %v101
    %v118 = vadd.f32 %v89, %v117
    %v119 = vadd.f32 %v118, %v110
    %v120 = vmul.f32 %v69, %v77
    %v121 = vmul.f32 %v84, %v83
    %v122 = vadd.f32 %v120, %v121
    %v123 = vmul.f32 %v85, %v81
    %v124 = vadd.f32 %v122, %v123
    %v125 = vmul.f32 %v86, %v79
    %v126 = vsub.f32 %v124, %v125
    %v127 = vmul.f32 %v69, %v79
    %v128 = vmul.f32 %v84, %v81
    %v129 = vsub.f32 %v127, %v128
    %v130 = vmul.f32 %v85, %v83
    %v131 = vadd.f32 %v129, %v130
    %v132 = vmul.f32 %v86, %v77
    %v133 = vadd.f32 %v131, %v132
    %v134 = vmul.f32 %v69, %v81
    %v135 = vmul.f32 %v84, %v79
    %v136 = vadd.f32 %v134, %v135
    %v137 = vmul.f32 %v85, %v77
    %v138 = vsub.f32 %v136, %v137
    %v139 = vmul.f32 %v86, %v83
    %v140 = vadd.f32 %v138, %v139
    %v141 = vmul.f32 %v69, %v83
    %v142 = vmul.f32 %v84, %v77
    %v143 = vsub.f32 %v141, %v142
    %v144 = vmul.f32 %v85, %v79
    %v145 = vsub.f32 %v143, %v144
    %v146 = vmul.f32 %v86, %v81
    %v147 = vsub.f32 %v145, %v146
    %v148 = vsub.f32 0.0, %v50
    %v149 = vsub.f32 0.0, %v52
    %v150 = vsub.f32 0.0, %v54
    %v151 = vsub.f32 %v113, %v44
    %v152 = vsub.f32 %v116, %v46
    %v153 = vsub.f32 %v119, %v48
    %v154 = vmul.f32 %v149, %v153
    %v155 = vmul.f32 %v150, %v152
    %v156 = vsub.f32 %v154, %v155
    %v157 = vmul.f32 %v150, %v151
    %v158 = vmul.f32 %v148, %v153
    %v159 = vsub.f32 %v157, %v158
    %v160 = vmul.f32 %v148, %v152
    %v161 = vmul.f32 %v149, %v151
    %v162 = vsub.f32 %v160, %v161
    %v163 = vmul.f32 %v156, 2.0
    %v164 = vmul.f32 %v159, 2.0
    %v165 = vmul.f32 %v162, 2.0
    %v166 = vmul.f32 %v149, %v165
    %v167 = vmul.f32 %v150, %v164
    %v168 = vsub.f32 %v166, %v167
    %v169 = vmul.f32 %v150, %v163
    %v170 = vmul.f32 %v148, %v165
    %v171 = vsub.f32 %v169, %v170
    %v172 = vmul.f32 %v148, %v164
    %v173 = vmul.f32 %v149, %v163
    %v174 = vsub.f32 %v172, %v173
    %v175 = vmul.f32 %v56, %v163
    %v176 = vadd.f32 %v151, %v175
    %v177 = vadd.f32 %v176, %v168
    %v178 = vmul.f32 %v56, %v164
    %v179 = vadd.f32 %v152, %v178
    %v180 = vadd.f32 %v179, %v171
    %v181 = vmul.f32 %v56, %v165
    %v182 = vadd.f32 %v153, %v181
    %v183 = vadd.f32 %v182, %v174
    %v184 = vmul.f32 %v56, %v126
    %v185 = vmul.f32 %v148, %v147
    %v186 = vadd.f32 %v184, %v185
    %v187 = vmul.f32 %v149, %v140
    %v188 = vadd.f32 %v186, %v187
    %v189 = vmul.f32 %v150, %v133
    %v190 = vsub.f32 %v188, %v189
    %v191 = vmul.f32 %v56, %v133
    %v192 = vmul.f32 %v148, %v140
    %v193 = vsub.f32 %v191, %v192
    %v194 = vmul.f32 %v149, %v147
    %v195 = vadd.f32 %v193, %v194
    %v196 = vmul.f32 %v150, %v126
    %v197 = vadd.f32 %v195, %v196
    %v198 = vmul.f32 %v56, %v140
    %v199 = vmul.f32 %v148, %v133
    %v200 = vadd.f32 %v198, %v199
    %v201 = vmul.f32 %v149, %v126
    %v202 = vsub.f32 %v200, %v201
    %v203 = vmul.f32 %v150, %v147
    %v204 = vadd.f32 %v202, %v203
    %v205 = vmul.f32 %v56, %v147
    %v206 = vmul.f32 %v148, %v126
    %v207 = vsub.f32 %v205, %v206
    %v208 = vmul.f32 %v149, %v133
    %v209 = vsub.f32 %v207, %v208
    %v210 = vmul.f32 %v150, %v140
    %v211 = vsub.f32 %v209, %v210
    %vm212 = vcmp.lt.f32.partialorder %v211, 0.0
    %v213 = vsel %vm212, -1.0, 1.0
    %v214 = vmul.f32 %v213, %v190
    %v215 = vmul.f32 %v213, %v197
    %v216 = vmul.f32 %v213, %v204
    %v217 = vmul.f32 %v213, %v211
    %v218 = vmul.f32 %v214, %v214
    %v219 = vmul.f32 %v215, %v215
    %v220 = vadd.f32 %v218, %v219
    %v221 = vmul.f32 %v216, %v216
    %v222 = vadd.f32 %v220, %v221
    %vm223 = vcmp.lt.f32.partialorder %v222, 1e-12
    %v224 = vmax.f32 %v222, 1e-30
    %v225 = vrsqrt.pop %v224
    %v226 = vmul.f32 %v225, %v224
    %v227 = vmul.f32 %v226, %v225
    %v228 = vmul.f32 0.5, %v227
    %v229 = vsub.f32 1.5, %v228
    %v230 = vmul.f32 %v225, %v229
    %vm231 = vweird.f32 %v224
    %vm232 = vweird.f32 %v225
    %vm233 = vmor %vm231, %vm232
    %v234 = vsel %vm233, %v225, %v230
    %v235 = vmul.f32 %v222, %v234
    %v236 = vand.u32 2147483647, %v217
    %v237 = vand.u32 2147483647, %v235
    %v238 = vmin.f32 %v236, %v237
    %v239 = vmax.f32 %v236, %v237
    %v240 = vrcp.pop %v239
    %v241 = vmul.f32 %v239, %v240
    %v242 = vsub.f32 1.0, %v241
    %v243 = vmul.f32 %v240, %v242
    %v244 = vadd.f32 %v240, %v243
    %vm245 = vweird.f32 %v239
    %vm246 = vweird.f32 %v240
    %vm247 = vmor %vm245, %vm246
    %v248 = vsel %vm247, %v240, %v244
    %v249 = vand.u32 2147483647, %v239
    %vm250 = vcmp.eq.f32.partialorder %v249, 8.507059e+37
    %v251 = vand.u32 %v239, 2147483648
    %v252 = vor.u32 1.1754944e-38, %v251
    %v253 = vsel %vm250, %v252, %v248
    %v254 = vmul.f32 %v238, %v253
    %v255 = vmul.f32 %v254, %v254
    %v256 = vmul.f32 0.002785687, %v255
    %v257 = vadd.f32 %v256, -0.015866
    %v258 = vmul.f32 %v257, %v255
    %v259 = vadd.f32 %v258, 0.04247222
    %v260 = vmul.f32 %v259, %v255
    %v261 = vadd.f32 %v260, -0.074975304
    %v262 = vmul.f32 %v261, %v255
    %v263 = vadd.f32 %v262, 0.1064488
    %v264 = vmul.f32 %v263, %v255
    %v265 = vadd.f32 %v264, -0.14207031
    %v266 = vmul.f32 %v265, %v255
    %v267 = vadd.f32 %v266, 0.19993454
    %v268 = vmul.f32 %v267, %v255
    %v269 = vadd.f32 %v268, -0.33333147
    %v270 = vmul.f32 %v269, %v255
    %v271 = vmul.f32 %v270, %v254
    %v272 = vadd.f32 %v271, %v254
    %vm273 = vcmp.gt.f32.partialorder %v237, %v236
    %v274 = vsub.f32 1.5707964, %v272
    %v275 = vsel %vm273, %v274, %v272
    %vm276 = vcmp.lt.f32.partialorder %v217, 0.0
    %v277 = vsub.f32 3.1415927, %v275
    %v278 = vsel %vm276, %v277, %v275
    %vm279 = vcmp.lt.s32.totalorder %v217, 0
    %v280 = vsel %vm279, 3.1415927, 0.0
    %vm281 = vcmp.eq.f32.partialorder %v235, 0.0
    %v282 = vsel %vm281, %v280, %v278
    %vm283 = vcmp.ne.f32.partialorder %v217, %v217
    %vm284 = vcmp.ne.f32.partialorder %v235, %v235
    %vm285 = vmor %vm283, %vm284
    %v286 = vsel %vm285, nan, %v282
    %vm287 = vcmp.lt.f32.partialorder %v217, 0.0
    %v288 = vsel %vm287, 2.3561945, 0.7853982
    %vm289 = vcmp.eq.s32.totalorder %v236, inf
    %vm290 = vcmp.eq.s32.totalorder %v237, inf
    %vm291 = vmand %vm289, %vm290
    %v292 = vsel %vm291, %v288, %v286
    %v293 = vand.u32 2147483647, %v292
    %v294 = vand.u32 %v235, 2147483648
    %v295 = vor.u32 %v293, %v294
    %v296 = vmul.f32 %v295, 2.0
    %v297 = vsel %vm223, 1.0, %v296
    %v298 = vrcp.pop %v297
    %v299 = vmul.f32 %v297, %v298
    %v300 = vsub.f32 1.0, %v299
    %v301 = vmul.f32 %v298, %v300
    %v302 = vadd.f32 %v298, %v301
    %vm303 = vweird.f32 %v297
    %vm304 = vweird.f32 %v298
    %vm305 = vmor %vm303, %vm304
    %v306 = vsel %vm305, %v298, %v302
    %v307 = vand.u32 2147483647, %v297
    %vm308 = vcmp.eq.f32.partialorder %v307, 8.507059e+37
    %v309 = vand.u32 %v297, 2147483648
    %v310 = vor.u32 1.1754944e-38, %v309
    %v311 = vsel %vm308, %v310, %v306
    %v312 = vmul.f32 1.0, %v311
    %v313 = vmax.f32 %v217, 1e-06
    %v314 = vrcp.pop %v313
    %v315 = vmul.f32 %v313, %v314
    %v316 = vsub.f32 1.0, %v315
    %v317 = vmul.f32 %v314, %v316
    %v318 = vadd.f32 %v314, %v317
    %vm319 = vweird.f32 %v313
    %vm320 = vweird.f32 %v314
    %vm321 = vmor %vm319, %vm320
    %v322 = vsel %vm321, %v314, %v318
    %v323 = vand.u32 2147483647, %v313
    %vm324 = vcmp.eq.f32.partialorder %v323, 8.507059e+37
    %v325 = vand.u32 %v313, 2147483648
    %v326 = vor.u32 1.1754944e-38, %v325
    %v327 = vsel %vm324, %v326, %v322
    %v328 = vmul.f32 1.0, %v327
    %v329 = vmul.f32 %v328, 2.0
    %v330 = vmul.f32 %v222, 0.6666667
    %v331 = vmul.f32 %v330, %v328
    %v332 = vmul.f32 %v331, %v328
    %v333 = vmul.f32 %v332, %v328
    %v334 = vsub.f32 %v329, %v333
    %v335 = vmul.f32 %v296, %v234
    %v336 = vsel %vm223, %v334, %v335
    %v337 = vmul.f32 %v336, %v214
    %v338 = vmul.f32 %v336, %v215
    %v339 = vmul.f32 %v336, %v216
    %v340 = vmul.f32 %v312, %v312
    %v341 = vmul.f32 %v217, 0.5
    %v342 = vmul.f32 %v341, %v312
    %v343 = vmul.f32 %v342, %v234
    %v344 = vsub.f32 %v340, %v343
    %v345 = vsel %vm223, 0.083333336, %v344
    %v346 = vmul.f32 %v338, %v183
    %v347 = vmul.f32 %v339, %v180
    %v348 = vsub.f32 %v346, %v347
    %v349 = vmul.f32 %v339, %v177
    %v350 = vmul.f32 %v337, %v183
    %v351 = vsub.f32 %v349, %v350
    %v352 = vmul.f32 %v337, %v180
    %v353 = vmul.f32 %v338, %v177
    %v354 = vsub.f32 %v352, %v353
    %v355 = vmul.f32 %v338, %v354
    %v356 = vmul.f32 %v339, %v351
    %v357 = vsub.f32 %v355, %v356
    %v358 = vmul.f32 %v339, %v348
    %v359 = vmul.f32 %v337, %v354
    %v360 = vsub.f32 %v358, %v359
    %v361 = vmul.f32 %v337, %v351
    %v362 = vmul.f32 %v338, %v348
    %v363 = vsub.f32 %v361, %v362
    %v364 = vmul.f32 %v348, 0.5
    %v365 = vsub.f32 %v177, %v364
    %v366 = vmul.f32 %v345, %v357
    %v367 = vadd.f32 %v365, %v366
    %v368 = vmul.f32 %v351, 0.5
    %v369 = vsub.f32 %v180, %v368
    %v370 = vmul.f32 %v345, %v360
    %v371 = vadd.f32 %v369, %v370
    %v372 = vmul.f32 %v354, 0.5
    %v373 = vsub.f32 %v183, %v372
    %v374 = vmul.f32 %v345, %v363
    %v375 = vadd.f32 %v373, %v374
    %376 = vst [vmem:[#allocation7] sm:$0xff] %v367
    %s377 = scalar_lea.vmem [#allocation7], 8
    %378 = vst [vmem:[%s377] sm:$0xff] %v371
    %s379 = scalar_lea.vmem [#allocation7], 16
    %380 = vst [vmem:[%s379] sm:$0xff] %v375
    %s381 = scalar_lea.vmem [#allocation7], 24
    %382 = vst [vmem:[%s381] sm:$0xff] %v337
    %s383 = scalar_lea.vmem [#allocation7], 32
    %384 = vst [vmem:[%s383] sm:$0xff] %v338
    %s385 = scalar_lea.vmem [#allocation7], 40
    %386 = vst [vmem:[%s385] sm:$0xff] %v339
    // Predicated region
    $region18: #{tpu_custom_call.1} parent=1 // pred_check
      _
    $region19: #{tpu_custom_call.1} parent=1 // pred_check_branch
      %388 = sbr.rel (0) target = $region21
    $region20: #{tpu_custom_call.1} parent=1 // pred_region
      %390 = vsyncadd [#allocation4], 0
      %s391 = sshll.u32 [#allocation7], 4
      %s392 = int_to_ptr.vmem [resolvable:$true] %s391
      %s393 = sshll.u32 %s2, 4
      %s394 = int_to_ptr.hbm [resolvable:$true] %s393
      %399 = dma.vmem_to_hbm [thread:$0]  %s392, 768, %s394, [#allocation4], 128, 128, 8
    $region21: #{tpu_custom_call.1} parent=1 // pred_fallthru
      _
    // Predicated region
    $region22: #{tpu_custom_call.1} parent=1 // pred_check
      _
    $region23: #{tpu_custom_call.1} parent=1 // pred_check_branch
      %401 = sbr.rel (0) target = $region25
    $region24: #{tpu_custom_call.1} parent=1 // pred_region
      %403 = dma.done [#allocation4], 768
    $region25: #{tpu_custom_call.1} parent=1 // pred_fallthru
      _
    %404 = vsyncpa [#allocation3], 1
    %405 = vsyncpa [#allocation6], 1
    %406 = vsyncpa [#allocation4], 1

</llo_original>
